<compile_context>
chip_gen: v7x
topology: tpu7x:2x2x1
jax: 0.10.0
libtpu: 0.0.40
codegen_flags: <defaults>
</compile_context>

<pallas_src>
import functools

import jax
import jax.numpy as jnp
from jax import lax
from jax.experimental import pallas as pl
from jax.experimental.pallas import tpu as pltpu

_EPS = 1e-07
_INT32_MIN = -(2 ** 31)
_INT32_MAX = 2 ** 31 - 1
_SIGN_MASK = 0x7FFFFFFF


def _to_sortable_key(bits_i32):
    """Order-preserving map: f32 bit pattern (as int32) -> int32 key whose
    signed ordering matches the float ordering.  The map is an involution."""
    return bits_i32 ^ ((bits_i32 >> 31) & _SIGN_MASK)


def _sparse_attn_kernel(x_ref, o_ref, *, top_k, eps):
    x = x_ref[...].astype(jnp.float32)                 # (bm, T)
    bm, _ = x.shape

    # ---- order-preserving int32 keys ---------------------------------------
    keys = _to_sortable_key(lax.bitcast_convert_type(x, jnp.int32))

    # ---- exact 32-step bisection for the k-th largest key of each row ------
    # K = max{ t : #{keys >= t} >= top_k }  (matches torch.topk's k-th value,
    # ties counted with multiplicity).
    lo = jnp.full((bm, 1), _INT32_MIN, dtype=jnp.int32)    # always feasible
    hi = jnp.full((bm, 1), _INT32_MAX, dtype=jnp.int32)

    def body(_, carry):
        lo, hi = carry
        # mid = ceil((lo + hi) / 2), computed without int32 overflow
        mid = (lo >> 1) + (hi >> 1) + ((lo | hi) & 1)
        cnt = jnp.sum((keys >= mid).astype(jnp.int32), axis=1, keepdims=True)
        feasible = cnt >= top_k
        lo = jnp.where(feasible, mid, lo)
        hi = jnp.where(feasible, hi, mid - 1)
        return lo, hi

    lo, _ = lax.fori_loop(0, 32, body, (lo, hi))

    kth = lax.bitcast_convert_type(_to_sortable_key(lo), jnp.float32)  # (bm, 1)

    # ---- clamp + renormalize -------------------------------------------------
    attn_w = jnp.maximum(x - (kth + eps), 0.0)
    denom = jnp.sum(attn_w, axis=1, keepdims=True) + eps
    inv = 1.0 / denom                                   # one reciprocal per row
    o_ref[...] = (attn_w * inv).astype(o_ref.dtype)


def _pick_block_rows(B, T, max_rows=512):
    """Largest row block that (a) divides B, (b) keeps the f32 working set
    (~8 copies of a (bm, T) tile) inside every generation's scoped VMEM, and
    (c) leaves >= 2 grid steps so both v7x TensorCores get work."""
    if B % 8:
        return B                    # non-multiple-of-8 blocks only legal at full extent
    cap = max(8, (((24 << 20) // (32 * max(T, 1))) // 8) * 8)
    bm = min(max_rows, cap, B)
    bm -= bm % 8
    while B % bm:
        bm -= 8
    if bm == B and B >= 16 and (B // 2) % 8 == 0:
        bm = B // 2                 # keep >= 2 parallel grid steps (v7x dual-TC)
    return bm


def sparse_attention(attn_s, top_k=5, block_rows=512):
    """Pallas-TPU equivalent of Sparse_attention.forward (attn_s: (B, T))."""
    B, T = attn_s.shape
    if T <= top_k:                  # same static early-return as the PyTorch module
        return attn_s

    bm = _pick_block_rows(B, T, block_rows)
    grid = (B // bm,)

    kernel = functools.partial(_sparse_attn_kernel, top_k=top_k, eps=_EPS)

    # ~32 bisection steps (compare + add) + epilogue per element; 1 read + 1 write.
    cost = pl.CostEstimate(
        flops=int(B * T * 70),
        transcendentals=0,
        bytes_accessed=int(2 * B * T * attn_s.dtype.itemsize),
    )

    return pl.pallas_call(
        kernel,
        out_shape=jax.ShapeDtypeStruct((B, T), attn_s.dtype),
        grid_spec=pltpu.PrefetchScalarGridSpec(
            num_scalar_prefetch=0,
            grid=grid,
            in_specs=[pl.BlockSpec((bm, T), lambda i: (i, 0))],
            out_specs=pl.BlockSpec((bm, T), lambda i: (i, 0)),
        ),
        compiler_params=pltpu.CompilerParams(
            dimension_semantics=("parallel",),
            vmem_limit_bytes=32 * 1024 * 1024,   # explicit: v5e default scope is 16 MiB
        ),
        cost_estimate=cost,
    )(attn_s)


def _reference(attn_s, top_k=5):
    """Pure-JAX reference mirroring the PyTorch code (for verification)."""
    eps = 1e-07
    B, T = attn_s.shape
    if T <= top_k:
        return attn_s
    delta = lax.top_k(attn_s, top_k)[0][:, -1] + eps
    attn_w = jnp.maximum(attn_s - delta[:, None], 0.0)
    attn_w_sum = jnp.sum(attn_w, axis=1, keepdims=True) + eps
    return attn_w / attn_w_sum


if __name__ == "__main__":
    key = jax.random.PRNGKey(0)
    k1, k2, k3 = jax.random.split(key, 3)

    # small shape consistent with the module: (batch, time_step)
    attn_s = jax.random.uniform(k1, (16, 16), dtype=jnp.float32)
    out = jax.block_until_ready(sparse_attention(attn_s, top_k=5))
    ref = _reference(attn_s, top_k=5)
    assert out.shape == ref.shape
    assert jnp.allclose(out, ref, atol=1e-6, rtol=1e-5), "mismatch (16, 16)"

    # larger, lane-dense block with negative values (exercises the sortable-key map)
    attn_s2 = jax.random.normal(k2, (64, 256), dtype=jnp.float32)
    out2 = jax.block_until_ready(sparse_attention(attn_s2, top_k=5))
    ref2 = _reference(attn_s2, top_k=5)
    assert jnp.allclose(out2, ref2, atol=1e-6, rtol=1e-5), "mismatch (64, 256)"

    # early-return branch (time_step <= top_k)
    small = jax.random.uniform(k3, (4, 4), dtype=jnp.float32)
    out_small = jax.block_until_ready(sparse_attention(small, top_k=5))
    assert jnp.allclose(out_small, small)

    print("KERNEL_OK")
</pallas_src>

<mosaic_0001>
module attributes {stable_mosaic.version = 11 : i64} {
  func.func @_sparse_attn_kernel(%arg0: i32, %arg1: memref<8x16xf32, #tpu.memory_space<vmem>>, %arg2: memref<8x16xf32, #tpu.memory_space<vmem>>) attributes {dimension_semantics = [#tpu.dimension_semantics<parallel>], iteration_bounds = array<i64: 2>, scalar_prefetch = 0 : i64, scratch_operands = 0 : i64, tpu.core_type = #tpu.core_type<tc>, window_params = [{transform_indices = @transform_0, window_bounds = array<i64: 8, 16>}, {transform_indices = @transform_1, window_bounds = array<i64: 8, 16>}]} {
    %c0 = arith.constant 0 : index
    %c0_0 = arith.constant 0 : index
    %0 = vector.load %arg1[%c0, %c0_0] : memref<8x16xf32, #tpu.memory_space<vmem>>, vector<8x16xf32>
    %1 = tpu.bitcast %0 : vector<8x16xf32> -> vector<8x16xi32>
    %c31_i32 = arith.constant 31 : i32
    %2 = vector.broadcast %c31_i32 : i32 to vector<8x16xi32>
    %3 = arith.shrsi %1, %2 : vector<8x16xi32>
    %c2147483647_i32 = arith.constant 2147483647 : i32
    %4 = vector.broadcast %c2147483647_i32 : i32 to vector<8x16xi32>
    %5 = arith.andi %3, %4 : vector<8x16xi32>
    %6 = arith.xori %1, %5 : vector<8x16xi32>
    %c-2147483648_i32 = arith.constant -2147483648 : i32
    %7 = vector.broadcast %c-2147483648_i32 : i32 to vector<8x1xi32>
    %c2147483647_i32_1 = arith.constant 2147483647 : i32
    %8 = vector.broadcast %c2147483647_i32_1 : i32 to vector<8x1xi32>
    %c0_i32 = arith.constant 0 : i32
    %c32_i32 = arith.constant 32 : i32
    %9 = arith.addi %c0_i32, %c32_i32 : i32
    %c1_i32 = arith.constant 1 : i32
    %10:2 = scf.for %arg3 = %c0_i32 to %9 step %c1_i32 iter_args(%arg4 = %7, %arg5 = %8) -> (vector<8x1xi32>, vector<8x1xi32>)  : i32 {
      %c1_i32_10 = arith.constant 1 : i32
      %32 = vector.broadcast %c1_i32_10 : i32 to vector<8x1xi32>
      %33 = arith.shrsi %arg4, %32 : vector<8x1xi32>
      %c1_i32_11 = arith.constant 1 : i32
      %34 = vector.broadcast %c1_i32_11 : i32 to vector<8x1xi32>
      %35 = arith.shrsi %arg5, %34 : vector<8x1xi32>
      %36 = arith.addi %33, %35 : vector<8x1xi32>
      %37 = arith.ori %arg4, %arg5 : vector<8x1xi32>
      %c1_i32_12 = arith.constant 1 : i32
      %38 = vector.broadcast %c1_i32_12 : i32 to vector<8x1xi32>
      %39 = arith.andi %37, %38 : vector<8x1xi32>
      %40 = arith.addi %36, %39 : vector<8x1xi32>
      %41 = vector.broadcast %40 : vector<8x1xi32> to vector<8x16xi32>
      %42 = arith.cmpi sge, %6, %41 : vector<8x16xi32>
      %43 = arith.extui %42 : vector<8x16xi1> to vector<8x16xi32>
      %cst_13 = arith.constant dense<0> : vector<8xi32>
      %44 = vector.multi_reduction <add>, %43, %cst_13 [1] : vector<8x16xi32> to vector<8xi32>
      %45 = vector.shape_cast %44 : vector<8xi32> to vector<8x1xi32>
      %c5_i32 = arith.constant 5 : i32
      %46 = vector.broadcast %c5_i32 : i32 to vector<8x1xi32>
      %47 = arith.cmpi sge, %45, %46 : vector<8x1xi32>
      %48 = arith.select %47, %40, %arg4 : vector<8x1xi1>, vector<8x1xi32>
      %c1_i32_14 = arith.constant 1 : i32
      %49 = vector.broadcast %c1_i32_14 : i32 to vector<8x1xi32>
      %50 = arith.subi %40, %49 : vector<8x1xi32>
      %51 = arith.select %47, %arg5, %50 : vector<8x1xi1>, vector<8x1xi32>
      scf.yield %48, %51 : vector<8x1xi32>, vector<8x1xi32>
    }
    %c31_i32_2 = arith.constant 31 : i32
    %11 = vector.broadcast %c31_i32_2 : i32 to vector<8x1xi32>
    %12 = arith.shrsi %10#0, %11 : vector<8x1xi32>
    %c2147483647_i32_3 = arith.constant 2147483647 : i32
    %13 = vector.broadcast %c2147483647_i32_3 : i32 to vector<8x1xi32>
    %14 = arith.andi %12, %13 : vector<8x1xi32>
    %15 = arith.xori %10#0, %14 : vector<8x1xi32>
    %16 = tpu.bitcast %15 : vector<8x1xi32> -> vector<8x1xf32>
    %cst = arith.constant 1.000000e-07 : f32
    %17 = vector.broadcast %cst : f32 to vector<8x1xf32>
    %18 = arith.addf %16, %17 : vector<8x1xf32>
    %19 = vector.broadcast %18 : vector<8x1xf32> to vector<8x16xf32>
    %20 = arith.subf %0, %19 : vector<8x16xf32>
    %cst_4 = arith.constant 0.000000e+00 : f32
    %21 = vector.broadcast %cst_4 : f32 to vector<8x16xf32>
    %22 = arith.maximumf %20, %21 : vector<8x16xf32>
    %cst_5 = arith.constant dense<0.000000e+00> : vector<8xf32>
    %23 = vector.multi_reduction <add>, %22, %cst_5 [1] : vector<8x16xf32> to vector<8xf32>
    %24 = vector.shape_cast %23 : vector<8xf32> to vector<8x1xf32>
    %cst_6 = arith.constant 1.000000e-07 : f32
    %25 = vector.broadcast %cst_6 : f32 to vector<8x1xf32>
    %26 = arith.addf %24, %25 : vector<8x1xf32>
    %cst_7 = arith.constant 1.000000e+00 : f32
    %27 = vector.broadcast %cst_7 : f32 to vector<8x1xf32>
    %28 = arith.divf %27, %26 : vector<8x1xf32>
    %29 = vector.broadcast %28 : vector<8x1xf32> to vector<8x16xf32>
    %30 = arith.mulf %22, %29 : vector<8x16xf32>
    %c0_8 = arith.constant 0 : index
    %c0_9 = arith.constant 0 : index
    %31 = vector.load %arg2[%c0_8, %c0_9] : memref<8x16xf32, #tpu.memory_space<vmem>>, vector<8x16xf32>
    tpu.vector_store %arg2[%c0_8, %c0_9], %30 {strides = array<i32>} : memref<8x16xf32, #tpu.memory_space<vmem>>, vector<8x16xf32>,
    return
  }
  func.func @transform_0(%arg0: i32) -> (i32, i32) {
    %c0_i32 = arith.constant 0 : i32
    %c0_i32_0 = arith.constant 0 : i32
    return %arg0, %c0_i32 : i32, i32
  }
  func.func @transform_1(%arg0: i32) -> (i32, i32) {
    %c0_i32 = arith.constant 0 : i32
    %c0_i32_0 = arith.constant 0 : i32
    return %arg0, %c0_i32 : i32, i32
  }
}

</mosaic_0001>

<llo_original>
// kernel: tpu_custom_call.1
$region0: #{tpu_custom_call.1}
  #allocation0 [shape = 'u32[]', space=smem, size = 0x4, offset = 0x4, fixed_abs, tag = 'smem constant byte address 0x4 - core index']
  #allocation1 [shape = 'u32[144,128]{1,0:T(1,128)}', space=vmem, size = 0x12000, scoped, tag = 'internal scratch']
  %s0 = inlined_call_operand.hbm [shape: f32[16,16], index: 0, kind: input, shape index: {}]
  %s1 = inlined_call_operand.hbm [shape: f32[16,16], index: 1, kind: output, shape index: {}]
  %s2 = sld [smem:[#allocation0]]
  $region48: #{tpu_custom_call.1} parent=0
    _
  %s4 = ssub.s32 1, %s2
  %s5 = scalar_select 0, %s4, %s2
  $region1: #{tpu_custom_call.1} parent=0
    #allocation2 [shape = 'u8[8192]{0}', space=vmem, size = 0x2000, scoped, tag = 'input window, operand 0']
    #allocation3 [shape = 's32[2]{0}', space=sflag, size = 0x8, scoped, tag = 'scoped memory for tpu_custom_call.1']
    #allocation4 [shape = 's32[2]{0}', space=sflag, size = 0x8, scoped, tag = 'scoped memory for tpu_custom_call.1']
    #allocation5 [shape = 'u8[8192]{0}', space=vmem, size = 0x2000, scoped, tag = 'output window, operand 0']
    %6 = vsyncpa [#allocation3], 0
    %s7 = scalar_lea.sflag [#allocation3], 1
    %8 = vsyncpa %s7, 0
    %9 = vsyncpa [#allocation4], 0
    %s10 = scalar_lea.sflag [#allocation4], 1
    %11 = vsyncpa %s10, 0
    loop: start=0, step=1, limit=4
    $region2: #{tpu_custom_call.1} parent=1 // loop_pre_header
      _
    $region3: #{tpu_custom_call.1} parent=1 // loop_header
      %s13 = sphi 0, %s17
      %p14 = scmp.ge.s32.totalorder %s13, 4
      %s23 = sphi 0, %s25
      %s26 = sphi 0, %s23
      %s27 = sphi 0, %s26
      %s43 = sphi 0, %s27
      %s49 = sphi 0, %s51
      %s52 = sphi 0, %s49
      %s53 = sphi 0, %s52
      %s69 = sphi 0, %s53
    $region4: #{tpu_custom_call.1} parent=1 // loop_header_branch
      %16 = sbr.rel (%p14) target = $region8
    $region5: #{tpu_custom_call.1} parent=1 // loop_body
      %s18 = ssub.s32 %s13, 1
      %s19 = ssub.s32 %s13, 2
      %s20 = sadd.s32 %s13, 1
      %s21 = ssub.s32 %s13, %s20
      %p22 = scmp.eq.s32.totalorder %s21, 0
      %s24 = sadd.s32 %s23, 1
      %s25 = scalar_select %p22, %s23, %s24
      %p28 = pneg %p22
      %p29 = scmp.eq.s32.totalorder %s13, 1
      %p30 = por %p28, %p29
      %p31 = scmp.ne.s32.totalorder %s23, %s26
      %p32 = scmp.eq.s32.totalorder %s13, 0
      %p33 = por %p31, %p32
      %p34 = scmp.ne.s32.totalorder %s23, %s26
      %p35 = scmp.eq.s32.totalorder %s18, 1
      %p36 = por %p34, %p35
      %p37 = scmp.ne.s32.totalorder %s26, %s27
      %p38 = scmp.eq.s32.totalorder %s18, 0
      %p39 = por %p37, %p38
      %p40 = scmp.ne.s32.totalorder %s26, %s27
      %p41 = scmp.eq.s32.totalorder %s19, 1
      %p42 = por %p40, %p41
      %p44 = scmp.ne.s32.totalorder %s27, %s43
      %p45 = scmp.eq.s32.totalorder %s19, 0
      %p46 = por %p44, %p45
      %s47 = ssub.s32 %s13, %s20
      %p48 = scmp.eq.s32.totalorder %s47, 0
      %s50 = sadd.s32 %s49, 1
      %s51 = scalar_select %p48, %s49, %s50
      %p54 = pneg %p48
      %p55 = scmp.eq.s32.totalorder %s13, 1
      %p56 = por %p54, %p55
      %p57 = scmp.ne.s32.totalorder %s49, %s52
      %p58 = scmp.eq.s32.totalorder %s13, 0
      %p59 = por %p57, %p58
      %p60 = scmp.ne.s32.totalorder %s49, %s52
      %p61 = scmp.eq.s32.totalorder %s18, 1
      %p62 = por %p60, %p61
      %p63 = scmp.ne.s32.totalorder %s52, %s53
      %p64 = scmp.eq.s32.totalorder %s18, 0
      %p65 = por %p63, %p64
      %p66 = scmp.ne.s32.totalorder %s52, %s53
      %p67 = scmp.eq.s32.totalorder %s19, 1
      %p68 = por %p66, %p67
      %p70 = scmp.ne.s32.totalorder %s53, %s69
      %p71 = scmp.eq.s32.totalorder %s19, 0
      %p72 = por %p70, %p71
      %p73 = scmp.le.s32.totalorder 1, %s13
      %p74 = scmp.lt.s32.totalorder %s13, 3
      %p75 = pnand %p73, %p74
      %p76 = pneg %p75
      // Predicated region
      $region9: #{tpu_custom_call.1} parent=5 // pred_check
        _
      $region10: #{tpu_custom_call.1} parent=5 // pred_check_branch
        %78 = sbr.rel (%p75) target = $region12
      $region11: #{tpu_custom_call.1} parent=5 // pred_region
        %s79 = ssub.s32 %s13, 1
      $region12: #{tpu_custom_call.1} parent=5 // pred_fallthru
        _
      %p80 = scmp.lt.s32.totalorder %s13, 2
      // Predicated region
      $region13: #{tpu_custom_call.1} parent=5 // pred_check
        %p81 = pneg %p80
      $region14: #{tpu_custom_call.1} parent=5 // pred_check_branch
        %83 = sbr.rel (%p81) target = $region16
      $region15: #{tpu_custom_call.1} parent=5 // pred_region
        // Predicated region
        $region17: #{tpu_custom_call.1} parent=15 // pred_check
          %p84 = pneg %p33
        $region18: #{tpu_custom_call.1} parent=15 // pred_check_branch
          %86 = sbr.rel (%p84) target = $region20
        $region19: #{tpu_custom_call.1} parent=15 // pred_region
          %s87 = sand.u32 %s23, 1
          %s88 = scalar_lea.sflag [#allocation3], %s87
          %s89 = sand.u32 %s23, 1
          %s90 = smul.addr %s89, 8
          %s91 = scalar_lea.vmem [#allocation2], %s90
          %s93 = ssub.s32 128, 128
          %94 = vsyncadd %s88, %s93
          %s95 = smul.addr %s13, 128
          %s96 = scalar_lea.hbm %s0, %s95
          %s98 = sshll.u32 %s91, 4
          %s99 = int_to_ptr.vmem [resolvable:$true] %s98
          %101 = dma.hbm_to_vmem [thread:$0]  %s96, 128, %s99, %s88
        $region20: #{tpu_custom_call.1} parent=15 // pred_fallthru
          _
      $region16: #{tpu_custom_call.1} parent=5 // pred_fallthru
        _
      %p102 = scmp.le.s32.totalorder 1, %s13
      %p103 = scmp.lt.s32.totalorder %s13, 3
      %p104 = pnand %p102, %p103
      %p105 = pneg %p104
      // Predicated region
      $region21: #{tpu_custom_call.1} parent=5 // pred_check
        _
      $region22: #{tpu_custom_call.1} parent=5 // pred_check_branch
        %107 = sbr.rel (%p104) target = $region24
      $region23: #{tpu_custom_call.1} parent=5 // pred_region
        %s108 = ssub.s32 %s13, 1
        %s109 = sand.u32 %s26, 1
        %s110 = scalar_lea.sflag [#allocation3], %s109
        %s111 = sand.u32 %s26, 1
        %s112 = smul.addr %s111, 8
        %s113 = scalar_lea.vmem [#allocation2], %s112
        // Predicated region
        $region25: #{tpu_custom_call.1} parent=23 // pred_check
          %p114 = pneg %p39
        $region26: #{tpu_custom_call.1} parent=23 // pred_check_branch
          %116 = sbr.rel (%p114) target = $region28
        $region27: #{tpu_custom_call.1} parent=23 // pred_region
          %117 = dma.done %s110, 128
        $region28: #{tpu_custom_call.1} parent=23 // pred_fallthru
          _
        %s118 = sand.u32 %s26, 1
        %s119 = scalar_lea.sflag [#allocation3], %s118
        %s120 = sand.u32 %s26, 1
        %s121 = smul.addr %s120, 8
        %s122 = scalar_lea.vmem [#allocation2], %s121
        %p123 = pneg %p39
        %p124 = pneg %p36
        %p125 = pneg %p65
        %p126 = pneg %p62
        %s127 = sand.u32 %s52, 1
        %s128 = scalar_lea.sflag [#allocation4], %s127
        %s129 = sand.u32 %s52, 1
        %s130 = smul.addr %s129, 8
        %s131 = scalar_lea.vmem [#allocation5], %s130
        %v132 = vld [vmem:[%s113] sm:$0xff]
        %v134 = vshra.s32 %v132, 31
        %v135 = vand.u32 %v134, 2147483647
        %v136 = vxor.u32 %v132, %v135
        loop: start=0, step=1, limit=32
        $region29: #{tpu_custom_call.1} parent=23 // loop_pre_header
          _
        $region30: #{tpu_custom_call.1} parent=23 // loop_header
          %s138 = sphi 0, %s142
          %p139 = scmp.ge.s32.totalorder %s138, 32
          %v143 = vphi 2147483648, %v168
          %v144 = vphi 2147483647, %v170
        $region31: #{tpu_custom_call.1} parent=23 // loop_header_branch
          %141 = sbr.rel (%p139) target = $region35
        $region32: #{tpu_custom_call.1} parent=23 // loop_body
          %v145 = vshra.s32 %v143, 1
          %v146 = vshra.s32 %v144, 1
          %v147 = vadd.s32 %v145, %v146
          %v148 = vor.u32 %v143, %v144
          %v149 = vand.u32 %v148, 1
          %v150 = vadd.s32 %v147, %v149
          %vm151 = vcmp.ge.s32.totalorder %v136, %v150
          %v152 = vsel %vm151, 1, 0
          %vm153 = vcmask 130048
          %v154 = vsel %vm153, %v152, 0
          %v155 = vand.u32 %v154, 65535
          %v156 = vshrl.u32 %v154, 16
          %v157 = vcvt.s32.f32 %v155
          %v158 = vcvt.s32.f32 %v156
          %159 = vadd.xlane.f32.xlu0 %v157
          %v160 = vpop.xlane.xlu0 %159
          %161 = vadd.xlane.f32.xlu0 %v158
          %v162 = vpop.xlane.xlu0 %161
          %v163 = vcvt.f32.s32 %v160
          %v164 = vcvt.f32.s32 %v162
          %v165 = vshll.u32 %v164, 16
          %v166 = vadd.s32 %v165, %v163
          %vm167 = vcmp.ge.s32.totalorder %v166, 5
          %v168 = vsel %vm167, %v150, %v143
          %v169 = vsub.s32 %v150, 1
          %v170 = vsel %vm167, %v144, %v169
        $region33: #{tpu_custom_call.1} parent=23 // loop_footer
          %s142 = sadd.s32 1, %s138
        $region34: #{tpu_custom_call.1} parent=23 // loop_footer_branch
          %137 = sbr.rel target = $region30
        $region35: #{tpu_custom_call.1} parent=23 // loop_exit
          _
        %v171 = vshra.s32 %v143, 31
        %v172 = vand.u32 %v171, 2147483647
        %v173 = vxor.u32 %v143, %v172
        %v175 = vadd.f32 %v173, 1e-07
        %v176 = vsub.f32 %v132, %v175
        %v177 = vmax.f32 %v176, 0.0
        %vm178 = vcmask 130048
        %v179 = vsel %vm178, %v177, 0.0
        %180 = vadd.xlane.f32.xlu0 %v179
        %v181 = vpop.xlane.xlu0 %180
        %v182 = vadd.f32 %v181, 1e-07
        %v183 = vrcp.pop %v182
        %v184 = vmul.f32 1.0, %v183
        %v185 = vmul.f32 %v177, %v184
        %186 = vst.msk [vmem:[%s131] sm:$0xff] %vm178, %v185
        %s187 = sand.u32 %s52, 1
        %s188 = scalar_lea.sflag [#allocation4], %s187
        %s189 = sand.u32 %s52, 1
        %s190 = smul.addr %s189, 8
        %s191 = scalar_lea.vmem [#allocation5], %s190
        // Predicated region
        $region36: #{tpu_custom_call.1} parent=23 // pred_check
          %p192 = pneg %p62
        $region37: #{tpu_custom_call.1} parent=23 // pred_check_branch
          %194 = sbr.rel (%p192) target = $region39
        $region38: #{tpu_custom_call.1} parent=23 // pred_region
          %s196 = ssub.s32 128, 128
          %197 = vsyncadd %s188, %s196
          %s198 = smul.addr %s18, 128
          %s199 = scalar_lea.hbm %s1, %s198
          %s201 = sshll.u32 %s191, 4
          %s202 = int_to_ptr.vmem [resolvable:$true] %s201
          %204 = dma.vmem_to_hbm [thread:$0]  %s202, 128, %s199, %s188
        $region39: #{tpu_custom_call.1} parent=23 // pred_fallthru
          _
      $region24: #{tpu_custom_call.1} parent=5 // pred_fallthru
        _
      %p205 = scmp.le.s32.totalorder 2, %s13
      // Predicated region
      $region40: #{tpu_custom_call.1} parent=5 // pred_check
        %p206 = pneg %p205
      $region41: #{tpu_custom_call.1} parent=5 // pred_check_branch
        %208 = sbr.rel (%p206) target = $region43
      $region42: #{tpu_custom_call.1} parent=5 // pred_region
        %s209 = ssub.s32 %s13, 2
        // Predicated region
        $region44: #{tpu_custom_call.1} parent=42 // pred_check
          %p210 = pneg %p68
        $region45: #{tpu_custom_call.1} parent=42 // pred_check_branch
          %212 = sbr.rel (%p210) target = $region47
        $region46: #{tpu_custom_call.1} parent=42 // pred_region
          %s213 = sand.u32 %s53, 1
          %s214 = scalar_lea.sflag [#allocation4], %s213
          %s215 = sand.u32 %s53, 1
          %s216 = smul.addr %s215, 8
          %s217 = scalar_lea.vmem [#allocation5], %s216
          %218 = dma.done %s214, 128
        $region47: #{tpu_custom_call.1} parent=42 // pred_fallthru
          _
      $region43: #{tpu_custom_call.1} parent=5 // pred_fallthru
        _
    $region6: #{tpu_custom_call.1} parent=1 // loop_footer
      %s17 = sadd.s32 1, %s13
    $region7: #{tpu_custom_call.1} parent=1 // loop_footer_branch
      %12 = sbr.rel target = $region3
    $region8: #{tpu_custom_call.1} parent=1 // loop_exit
      _
    %219 = vsyncpa [#allocation3], 1
    %s220 = scalar_lea.sflag [#allocation3], 1
    %221 = vsyncpa %s220, 1
    %222 = vsyncpa [#allocation4], 1
    %s223 = scalar_lea.sflag [#allocation4], 1
    %224 = vsyncpa %s223, 1

</llo_original>
